<compile_context>
chip_gen: v7x
topology: tpu7x:2x2x1
jax: 0.10.0
libtpu: 0.0.40
codegen_flags: <defaults>
</compile_context>

<pallas_src>
import jax
import jax.numpy as jnp
from jax import lax
from jax.experimental import pallas as pl
from jax.experimental.pallas import tpu as pltpu

DIM_IN = 128      # stand-in for int(2048 * width); 128 keeps lanes dense
FEAT_DIM = 128    # feat_dim of the projection heads (module default = 128)
K_JIG = 9         # jigsaw tiles per image (JigsawHead default k=9)
EPS = 1e-12       # L2-normalize guard (torch F.normalize clamps the norm instead)


# ----------------------------------------------------------------------------
# Generation-aware VMEM budget / tiling
# ----------------------------------------------------------------------------
def _vmem_limit_bytes():
    """~3/4 of physical VMEM, capped at 96 MiB (-> 48 MiB on v7x's 64 MiB/TC)."""
    cap = 128 * 1024 * 1024
    if hasattr(pltpu, "get_tpu_info"):
        try:
            cap = int(getattr(pltpu.get_tpu_info(), "vmem_capacity_bytes", cap))
        except Exception:
            pass
    return int(min(3 * cap // 4, 96 * 1024 * 1024))


def _pick_batch_tile(n):
    for tb in (8, 4, 2, 1):
        if n % tb == 0:
            return tb
    return 1


def _pick_hw_tile(hw, tb, k, vmem_limit, cap=4096):
    """Largest divisor of hw (multiple of 8, <= cap) whose per-step footprint
    (double-buffered bf16 patch block + f32 conv output before the GAP reduce)
    fits in half the VMEM budget; prefer >=2 grid steps so DMA pipelines."""
    def fits(t):
        patch = 2 * tb * t * k * 2          # double-buffered bf16 patches
        inter = tb * t * DIM_IN * 4         # f32 conv output intermediate
        return patch + inter <= vmem_limit // 2

    divs = [t for t in range(1, hw + 1) if hw % t == 0 and (t % 8 == 0 or t == hw)]
    pipelined = [t for t in divs if t <= cap and fits(t) and hw // t >= 2]
    if pipelined:
        return max(pipelined)
    ok = [t for t in divs if t <= cap and fits(t)]
    return max(ok) if ok else min(divs)


# ----------------------------------------------------------------------------
# im2col glue (channel-last, emitted directly in bf16 => half the HBM bytes)
# ----------------------------------------------------------------------------
def _im2col_nhwc(x_nchw):
    """(N, C, H, W) -> bf16 patches (N, H*W, C*3*3)."""
    n, c, h, w = x_nchw.shape
    x_nhwc = jnp.transpose(x_nchw, (0, 2, 3, 1))
    patches = lax.conv_general_dilated_patches(
        x_nhwc, filter_shape=(3, 3), window_strides=(1, 1), padding="SAME",
        dimension_numbers=("NHWC", "HWIO", "NHWC"))
    k = patches.shape[-1]
    return patches.reshape(n, h * w, k).astype(jnp.bfloat16), h * w, k


# ----------------------------------------------------------------------------
# Shared kernel: conv-stem matmul + bias + ReLU + GAP (+ optional head + L2-norm)
# Grid = (batch_blocks, hw_blocks); hw is the reduction axis (VMEM accumulator).
# ----------------------------------------------------------------------------
def make_enc_gap_kernel(inv_hw, tb, thw, k_dim, apply_head):
    def body(p_ref, cw_ref, cb_ref, head_w_ref, head_b_ref, o_ref, acc_ref):
        h = pl.program_id(1)

        @pl.when(h == 0)
        def _init():
            acc_ref[...] = jnp.zeros_like(acc_ref)

        # One (tb*thw, k) @ (k, DIM_IN) MXU matmul per step (bf16 in, f32 acc).
        # Major-dim merge / split is layout-free because thw % 8 == 0.
        p = p_ref[...].reshape(tb * thw, k_dim)
        y = jnp.dot(p, cw_ref[...], preferred_element_type=jnp.float32)
        y = jnp.maximum(y + cb_ref[...], 0.0)                       # bias + ReLU
        acc_ref[...] += jnp.sum(y.reshape(tb, thw, DIM_IN), axis=1)  # partial GAP

        @pl.when(h == pl.num_programs(1) - 1)
        def _finalize():
            enc = acc_ref[...] * inv_hw                              # (tb, DIM_IN)
            if apply_head:
                z = jnp.dot(enc.astype(jnp.bfloat16), head_w_ref[...],
                            preferred_element_type=jnp.float32) + head_b_ref[...]
                z = z * lax.rsqrt(jnp.sum(z * z, axis=1, keepdims=True) + EPS)
                o_ref[0] = z.astype(o_ref.dtype)
            else:
                o_ref[0] = enc.astype(o_ref.dtype)

    if apply_head:
        def kernel(p_ref, cw_ref, cb_ref, hw_ref, hb_ref, o_ref, acc_ref):
            body(p_ref, cw_ref, cb_ref, hw_ref, hb_ref, o_ref, acc_ref)
    else:
        def kernel(p_ref, cw_ref, cb_ref, o_ref, acc_ref):
            body(p_ref, cw_ref, cb_ref, None, None, o_ref, acc_ref)
    return kernel


def encoder_gap_forward(patches, enc_w, enc_b, head=None, *, tb,
                        out_dtype=jnp.float32):
    """patches: (N, HW, K) bf16.  Returns (N, FEAT_DIM) if head else (N, DIM_IN)."""
    n, hw, k = patches.shape
    assert n % tb == 0
    vmem_limit = _vmem_limit_bytes()
    thw = _pick_hw_tile(hw, tb, k, vmem_limit)
    apply_head = head is not None
    out_dim = FEAT_DIM if apply_head else DIM_IN

    in_specs = [
        pl.BlockSpec((tb, thw, k), lambda b, h: (b, h, 0)),
        pl.BlockSpec((k, DIM_IN), lambda b, h: (0, 0)),
        pl.BlockSpec((1, DIM_IN), lambda b, h: (0, 0)),
    ]
    args = [patches, enc_w.astype(jnp.bfloat16), enc_b.reshape(1, DIM_IN)]
    if apply_head:
        in_specs += [pl.BlockSpec((DIM_IN, FEAT_DIM), lambda b, h: (0, 0)),
                     pl.BlockSpec((1, FEAT_DIM), lambda b, h: (0, 0))]
        args += [head[0].astype(jnp.bfloat16), head[1].reshape(1, FEAT_DIM)]

    out = pl.pallas_call(
        make_enc_gap_kernel(1.0 / hw, tb, thw, k, apply_head),
        out_shape=jax.ShapeDtypeStruct((n // tb, tb, out_dim), out_dtype),
        grid_spec=pltpu.PrefetchScalarGridSpec(
            num_scalar_prefetch=0,
            grid=(n // tb, hw // thw),
            in_specs=in_specs,
            out_specs=pl.BlockSpec((1, tb, out_dim), lambda b, h: (b, 0, 0)),
            scratch_shapes=[pltpu.VMEM((tb, DIM_IN), jnp.float32)],
        ),
        compiler_params=pltpu.CompilerParams(
            dimension_semantics=("parallel", "arbitrary"),
            vmem_limit_bytes=vmem_limit,
        ),
    )(*args)
    return out.reshape(n, out_dim)


# ----------------------------------------------------------------------------
# JigsawHead epilogue kernel: fc1 + in-kernel shuffle + fc2 + L2-norm
# Tiny (bsz x 128 input); single grid step, ids scalar-prefetched into SMEM.
# ----------------------------------------------------------------------------
def make_jigsaw_epilogue_kernel(bsz, n_img):
    def kernel(ids_ref, enc_ref, w1_ref, b1_ref, w2_ref, b2_ref, o_ref,
               y1_ref, shuf_ref):
        y1 = jnp.dot(enc_ref[...], w1_ref[...],
                     preferred_element_type=jnp.float32) + b1_ref[...]
        y1_ref[...] = y1                                              # (bsz, FEAT)

        # Jigsaw shuffle + per-group flatten: destinations are static, lane-aligned
        # offsets (j*FEAT_DIM); only the source rows are dynamic (ids from SMEM).
        for g in range(n_img):
            for j in range(K_JIG):
                src = ids_ref[g * K_JIG + j]
                shuf_ref[pl.ds(g, 1), pl.ds(j * FEAT_DIM, FEAT_DIM)] = (
                    y1_ref[pl.ds(src, 1), :])

        y2 = jnp.dot(shuf_ref[...].astype(jnp.bfloat16), w2_ref[...],
                     preferred_element_type=jnp.float32) + b2_ref[...]
        y2 = y2 * lax.rsqrt(jnp.sum(y2 * y2, axis=1, keepdims=True) + EPS)
        o_ref[...] = y2.astype(o_ref.dtype)
    return kernel


def jigsaw_head_forward(enc_jig_bf16, params, ids):
    bsz = enc_jig_bf16.shape[0]
    n_img = bsz // K_JIG
    vmem_limit = _vmem_limit_bytes()
    return pl.pallas_call(
        make_jigsaw_epilogue_kernel(bsz, n_img),
        out_shape=jax.ShapeDtypeStruct((n_img, FEAT_DIM), jnp.float32),
        grid_spec=pltpu.PrefetchScalarGridSpec(
            num_scalar_prefetch=1,
            grid=(1,),
            in_specs=[
                pl.BlockSpec((bsz, DIM_IN), lambda i, sids: (0, 0)),
                pl.BlockSpec((DIM_IN, FEAT_DIM), lambda i, sids: (0, 0)),
                pl.BlockSpec((1, FEAT_DIM), lambda i, sids: (0, 0)),
                pl.BlockSpec((K_JIG * FEAT_DIM, FEAT_DIM), lambda i, sids: (0, 0)),
                pl.BlockSpec((1, FEAT_DIM), lambda i, sids: (0, 0)),
            ],
            out_specs=pl.BlockSpec((n_img, FEAT_DIM), lambda i, sids: (0, 0)),
            scratch_shapes=[
                pltpu.VMEM((bsz, FEAT_DIM), jnp.float32),             # fc1 output
                pltpu.VMEM((n_img, K_JIG * FEAT_DIM), jnp.float32),   # shuffled+flat
            ],
        ),
        compiler_params=pltpu.CompilerParams(
            dimension_semantics=("arbitrary",),
            vmem_limit_bytes=vmem_limit,
        ),
    )(ids, enc_jig_bf16,
      params["jig1_w"].astype(jnp.bfloat16), params["jig1_b"].reshape(1, FEAT_DIM),
      params["jig2_w"].astype(jnp.bfloat16), params["jig2_b"].reshape(1, FEAT_DIM))


# ----------------------------------------------------------------------------
# Parameters / jigsaw ids / forward
# ----------------------------------------------------------------------------
def init_params(key, c_in=4):
    ks = jax.random.split(key, 8)
    k_conv = c_in * 9

    def lin_init(kw, kb, fan_in, fan_out):
        s = 1.0 / jnp.sqrt(jnp.float32(fan_in))
        w = jax.random.uniform(kw, (fan_in, fan_out), jnp.float32, -s, s)
        b = jax.random.uniform(kb, (fan_out,), jnp.float32, -s, s)
        return w, b

    enc_w, enc_b = lin_init(ks[0], ks[1], k_conv, DIM_IN)                 # conv stem
    head_w, head_b = lin_init(ks[2], ks[3], DIM_IN, FEAT_DIM)             # self.head
    jig1_w, jig1_b = lin_init(ks[4], ks[5], DIM_IN, FEAT_DIM)             # JigsawHead.fc1
    jig2_w, jig2_b = lin_init(ks[6], ks[7], FEAT_DIM * K_JIG, FEAT_DIM)   # JigsawHead.fc2
    return dict(enc_w=enc_w, enc_b=enc_b, head_w=head_w, head_b=head_b,
                jig1_w=jig1_w, jig1_b=jig1_b, jig2_w=jig2_w, jig2_b=jig2_b)


def jigsaw_shuffle_ids(bsz, k, key):
    # TODO(synk): reference uses torch.randperm per forward call; replaced with a
    # deterministic per-group jax.random permutation (within-group, like the ref).
    n_img = bsz // k
    keys = jax.random.split(key, n_img)
    rnd = jnp.concatenate([jax.random.permutation(kk, k) for kk in keys])
    base = (jnp.arange(bsz) // k) * k
    return (rnd + base).astype(jnp.int32)


def rgb_multiheads_forward(params, x, x_jig=None, mode=0, *, shuffle_key=None):
    """Matches RGBMultiHeads.forward: mode 0 -> (feat, feat_jig), 1 -> feat, else encoder feat."""
    head = (params["head_w"], params["head_b"])
    if mode == 0:
        patches, _, _ = _im2col_nhwc(x)
        feat = encoder_gap_forward(patches, params["enc_w"], params["enc_b"],
                                   head=head, tb=_pick_batch_tile(x.shape[0]))
        patches_jig, _, _ = _im2col_nhwc(x_jig)
        # jig encoder: image groups of K_JIG are the parallel grid axis (v7x 2 TCs);
        # features emitted in bf16 (they feed a bf16 MXU matmul anyway).
        enc_jig = encoder_gap_forward(patches_jig, params["enc_w"], params["enc_b"],
                                      head=None, tb=K_JIG, out_dtype=jnp.bfloat16)
        ids = jigsaw_shuffle_ids(x_jig.shape[0], K_JIG, shuffle_key)
        feat_jig = jigsaw_head_forward(enc_jig, params, ids)
        return feat, feat_jig
    elif mode == 1:
        patches, _, _ = _im2col_nhwc(x)
        return encoder_gap_forward(patches, params["enc_w"], params["enc_b"],
                                   head=head, tb=_pick_batch_tile(x.shape[0]))
    else:
        patches, _, _ = _im2col_nhwc(x)
        return encoder_gap_forward(patches, params["enc_w"], params["enc_b"],
                                   head=None, tb=_pick_batch_tile(x.shape[0]))


# ----------------------------------------------------------------------------
# Pure-JAX reference (same bf16-in / f32-accumulate convention)
# ----------------------------------------------------------------------------
def _ref_encoder(x_nchw, enc_w, enc_b):
    patches, hw, k = _im2col_nhwc(x_nchw)                                  # bf16
    y = jnp.einsum("nhk,kc->nhc", patches, enc_w.astype(jnp.bfloat16),
                   preferred_element_type=jnp.float32)
    y = jnp.maximum(y + enc_b[None, None, :], 0.0)
    return jnp.mean(y, axis=1)


def _ref_l2head(z, w, b):
    y = jnp.dot(z.astype(jnp.bfloat16), w.astype(jnp.bfloat16),
                preferred_element_type=jnp.float32) + b
    return y * lax.rsqrt(jnp.sum(y * y, axis=1, keepdims=True) + EPS)


def _ref_jigsaw(x_jig, params, ids):
    enc = _ref_encoder(x_jig, params["enc_w"], params["enc_b"])
    y = jnp.dot(enc.astype(jnp.bfloat16), params["jig1_w"].astype(jnp.bfloat16),
                preferred_element_type=jnp.float32) + params["jig1_b"]
    y = y[ids].reshape(enc.shape[0] // K_JIG, K_JIG * FEAT_DIM)
    return _ref_l2head(y, params["jig2_w"], params["jig2_b"])


# ----------------------------------------------------------------------------
# Main
# ----------------------------------------------------------------------------
if __name__ == "__main__":
    key = jax.random.PRNGKey(0)
    k_params, k_x, k_xjig, k_shuf = jax.random.split(key, 4)

    N, C, H, W = 2, 4, 16, 16
    params = init_params(k_params, c_in=C)
    x = jax.random.normal(k_x, (N, C, H, W), jnp.float32)
    x_jig = jax.random.normal(k_xjig, (N * K_JIG, C, H, W), jnp.float32)

    feat, feat_jig = rgb_multiheads_forward(params, x, x_jig, mode=0,
                                            shuffle_key=k_shuf)
    enc_only = rgb_multiheads_forward(params, x, mode=2, shuffle_key=k_shuf)
    jax.block_until_ready((feat, feat_jig, enc_only))

    # correctness: pure-JAX reference with identical ids / bf16 convention
    ids = jigsaw_shuffle_ids(N * K_JIG, K_JIG, k_shuf)
    enc_ref = _ref_encoder(x, params["enc_w"], params["enc_b"])
    feat_ref = _ref_l2head(enc_ref, params["head_w"], params["head_b"])
    feat_jig_ref = _ref_jigsaw(x_jig, params, ids)

    assert feat.shape == (N, FEAT_DIM)
    assert feat_jig.shape == (N, FEAT_DIM)
    assert enc_only.shape == (N, DIM_IN)
    assert jnp.allclose(jnp.linalg.norm(feat, axis=1), 1.0, atol=1e-4)
    assert jnp.allclose(jnp.linalg.norm(feat_jig, axis=1), 1.0, atol=1e-4)
    assert jnp.allclose(enc_only, enc_ref, atol=5e-3, rtol=5e-2)
    assert jnp.allclose(feat, feat_ref, atol=5e-3, rtol=5e-2)
    assert jnp.allclose(feat_jig, feat_jig_ref, atol=5e-3, rtol=5e-2)
    print("KERNEL_OK")
</pallas_src>

<mosaic_0001>
module attributes {stable_mosaic.version = 11 : i64} {
  func.func @kernel(%arg0: i32, %arg1: i32, %arg2: memref<2x128x36xbf16, #tpu.memory_space<vmem>>, %arg3: memref<36x128xbf16, #tpu.memory_space<vmem>>, %arg4: memref<1x128xf32, #tpu.memory_space<vmem>>, %arg5: memref<128x128xbf16, #tpu.memory_space<vmem>>, %arg6: memref<1x128xf32, #tpu.memory_space<vmem>>, %arg7: memref<1x2x128xf32, #tpu.memory_space<vmem>>, %arg8: memref<2x128xf32, #tpu.memory_space<vmem>>) attributes {dimension_semantics = [#tpu.dimension_semantics<parallel>, #tpu.dimension_semantics<arbitrary>], iteration_bounds = array<i64: 1, 2>, scalar_prefetch = 0 : i64, scratch_operands = 1 : i64, tpu.core_type = #tpu.core_type<tc>, window_params = [{transform_indices = @transform_0, window_bounds = array<i64: 2, 128, 36>}, {pipeline_mode = #tpu.pipeline_mode<synchronous>, transform_indices = @transform_1, window_bounds = array<i64: 36, 128>}, {pipeline_mode = #tpu.pipeline_mode<synchronous>, transform_indices = @transform_2, window_bounds = array<i64: 1, 128>}, {pipeline_mode = #tpu.pipeline_mode<synchronous>, transform_indices = @transform_3, window_bounds = array<i64: 128, 128>}, {pipeline_mode = #tpu.pipeline_mode<synchronous>, transform_indices = @transform_4, window_bounds = array<i64: 1, 128>}, {transform_indices = @transform_5, window_bounds = array<i64: 1, 2, 128>}]} {
    %c0_i32 = arith.constant 0 : i32
    %0 = arith.cmpi eq, %arg1, %c0_i32 : i32
    %1 = arith.extui %0 : i1 to i32
    %c0_i32_0 = arith.constant 0 : i32
    %2 = arith.cmpi ne, %1, %c0_i32_0 : i32
    scf.if %2 {
      %cst_14 = arith.constant 0.000000e+00 : f32
      %20 = vector.broadcast %cst_14 : f32 to vector<2x128xf32>
      %c0_15 = arith.constant 0 : index
      %c0_16 = arith.constant 0 : index
      %21 = vector.load %arg8[%c0_15, %c0_16] : memref<2x128xf32, #tpu.memory_space<vmem>>, vector<2x128xf32>
      tpu.vector_store %arg8[%c0_15, %c0_16], %20 {strides = array<i32>} : memref<2x128xf32, #tpu.memory_space<vmem>>, vector<2x128xf32>,
    } else {
    }
    %c0 = arith.constant 0 : index
    %c0_1 = arith.constant 0 : index
    %c0_2 = arith.constant 0 : index
    %3 = vector.load %arg2[%c0, %c0_1, %c0_2] : memref<2x128x36xbf16, #tpu.memory_space<vmem>>, vector<2x128x36xbf16>
    %4 = vector.shape_cast %3 : vector<2x128x36xbf16> to vector<256x36xbf16>
    %c0_3 = arith.constant 0 : index
    %c0_4 = arith.constant 0 : index
    %5 = vector.load %arg3[%c0_3, %c0_4] : memref<36x128xbf16, #tpu.memory_space<vmem>>, vector<36x128xbf16>
    %cst = arith.constant dense<0.000000e+00> : vector<256x128xf32>
    %6 = tpu.matmul %4, %5, %cst {dimension_numbers = #tpu.dot_dimension_numbers<[1], [0], [0], [1], [0, 0, 1, 1], [], []>} : vector<256x36xbf16>, vector<36x128xbf16>, vector<256x128xf32> -> vector<256x128xf32>
    %c0_5 = arith.constant 0 : index
    %c0_6 = arith.constant 0 : index
    %7 = vector.load %arg4[%c0_5, %c0_6] : memref<1x128xf32, #tpu.memory_space<vmem>>, vector<1x128xf32>
    %8 = vector.broadcast %7 : vector<1x128xf32> to vector<256x128xf32>
    %9 = arith.addf %6, %8 : vector<256x128xf32>
    %cst_7 = arith.constant 0.000000e+00 : f32
    %10 = vector.broadcast %cst_7 : f32 to vector<256x128xf32>
    %11 = arith.maximumf %9, %10 : vector<256x128xf32>
    %c0_8 = arith.constant 0 : index
    %c0_9 = arith.constant 0 : index
    %12 = vector.load %arg8[%c0_8, %c0_9] : memref<2x128xf32, #tpu.memory_space<vmem>>, vector<2x128xf32>
    %13 = vector.shape_cast %11 : vector<256x128xf32> to vector<2x128x128xf32>
    %cst_10 = arith.constant dense<0.000000e+00> : vector<2x128xf32>
    %14 = vector.multi_reduction <add>, %13, %cst_10 [1] : vector<2x128x128xf32> to vector<2x128xf32>
    %15 = arith.addf %12, %14 : vector<2x128xf32>
    %c0_11 = arith.constant 0 : index
    %c0_12 = arith.constant 0 : index
    %16 = vector.load %arg8[%c0_11, %c0_12] : memref<2x128xf32, #tpu.memory_space<vmem>>, vector<2x128xf32>
    tpu.vector_store %arg8[%c0_11, %c0_12], %15 {strides = array<i32>} : memref<2x128xf32, #tpu.memory_space<vmem>>, vector<2x128xf32>,
    %c1_i32 = arith.constant 1 : i32
    %17 = arith.cmpi eq, %arg1, %c1_i32 : i32
    %18 = arith.extui %17 : i1 to i32
    %c0_i32_13 = arith.constant 0 : i32
    %19 = arith.cmpi ne, %18, %c0_i32_13 : i32
    scf.if %19 {
      %c0_14 = arith.constant 0 : index
      %c0_15 = arith.constant 0 : index
      %20 = vector.load %arg8[%c0_14, %c0_15] : memref<2x128xf32, #tpu.memory_space<vmem>>, vector<2x128xf32>
      %cst_16 = arith.constant 3.906250e-03 : f32
      %21 = vector.broadcast %cst_16 : f32 to vector<2x128xf32>
      %22 = arith.mulf %20, %21 : vector<2x128xf32>
      %23 = arith.truncf %22 : vector<2x128xf32> to vector<2x128xbf16>
      %c0_17 = arith.constant 0 : index
      %c0_18 = arith.constant 0 : index
      %24 = vector.load %arg5[%c0_17, %c0_18] : memref<128x128xbf16, #tpu.memory_space<vmem>>, vector<128x128xbf16>
      %cst_19 = arith.constant dense<0.000000e+00> : vector<2x128xf32>
      %25 = tpu.matmul %23, %24, %cst_19 {dimension_numbers = #tpu.dot_dimension_numbers<[1], [0], [0], [1], [0, 0, 1, 1], [], []>} : vector<2x128xbf16>, vector<128x128xbf16>, vector<2x128xf32> -> vector<2x128xf32>
      %c0_20 = arith.constant 0 : index
      %c0_21 = arith.constant 0 : index
      %26 = vector.load %arg6[%c0_20, %c0_21] : memref<1x128xf32, #tpu.memory_space<vmem>>, vector<1x128xf32>
      %27 = vector.broadcast %26 : vector<1x128xf32> to vector<2x128xf32>
      %28 = arith.addf %25, %27 : vector<2x128xf32>
      %29 = arith.mulf %28, %28 : vector<2x128xf32>
      %cst_22 = arith.constant dense<0.000000e+00> : vector<2xf32>
      %30 = vector.multi_reduction <add>, %29, %cst_22 [1] : vector<2x128xf32> to vector<2xf32>
      %31 = vector.shape_cast %30 : vector<2xf32> to vector<2x1xf32>
      %cst_23 = arith.constant 9.99999996E-13 : f32
      %32 = vector.broadcast %cst_23 : f32 to vector<2x1xf32>
      %33 = arith.addf %31, %32 : vector<2x1xf32>
      %34 = math.rsqrt %33 : vector<2x1xf32>
      %35 = vector.broadcast %34 : vector<2x1xf32> to vector<2x128xf32>
      %36 = arith.mulf %28, %35 : vector<2x128xf32>
      %c0_24 = arith.constant 0 : index
      %c0_25 = arith.constant 0 : index
      %c0_26 = arith.constant 0 : index
      %37 = vector.load %arg7[%c0_24, %c0_25, %c0_26] : memref<1x2x128xf32, #tpu.memory_space<vmem>>, vector<1x2x128xf32>
      %38 = vector.shape_cast %37 : vector<1x2x128xf32> to vector<2x128xf32>
      %39 = vector.shape_cast %36 : vector<2x128xf32> to vector<1x2x128xf32>
      tpu.vector_store %arg7[%c0_24, %c0_25, %c0_26], %39 {strides = array<i32>} : memref<1x2x128xf32, #tpu.memory_space<vmem>>, vector<1x2x128xf32>,
    } else {
    }
    return
  }
  func.func @transform_0(%arg0: i32, %arg1: i32) -> (i32, i32, i32) {
    %c0_i32 = arith.constant 0 : i32
    %c0_i32_0 = arith.constant 0 : i32
    return %arg0, %arg1, %c0_i32 : i32, i32, i32
  }
  func.func @transform_1(%arg0: i32, %arg1: i32) -> (i32, i32) {
    %c0_i32 = arith.constant 0 : i32
    %c0_i32_0 = arith.constant 0 : i32
    %c0_i32_1 = arith.constant 0 : i32
    return %c0_i32, %c0_i32_0 : i32, i32
  }
  func.func @transform_2(%arg0: i32, %arg1: i32) -> (i32, i32) {
    %c0_i32 = arith.constant 0 : i32
    %c0_i32_0 = arith.constant 0 : i32
    %c0_i32_1 = arith.constant 0 : i32
    return %c0_i32, %c0_i32_0 : i32, i32
  }
  func.func @transform_3(%arg0: i32, %arg1: i32) -> (i32, i32) {
    %c0_i32 = arith.constant 0 : i32
    %c0_i32_0 = arith.constant 0 : i32
    %c0_i32_1 = arith.constant 0 : i32
    return %c0_i32, %c0_i32_0 : i32, i32
  }
  func.func @transform_4(%arg0: i32, %arg1: i32) -> (i32, i32) {
    %c0_i32 = arith.constant 0 : i32
    %c0_i32_0 = arith.constant 0 : i32
    %c0_i32_1 = arith.constant 0 : i32
    return %c0_i32, %c0_i32_0 : i32, i32
  }
  func.func @transform_5(%arg0: i32, %arg1: i32) -> (i32, i32, i32) {
    %c0_i32 = arith.constant 0 : i32
    %c0_i32_0 = arith.constant 0 : i32
    %c0_i32_1 = arith.constant 0 : i32
    return %arg0, %c0_i32, %c0_i32_0 : i32, i32, i32
  }
}

</mosaic_0001>

<llo_original>
// kernel: tpu_custom_call.1
$region0: #{tpu_custom_call.1}
  #allocation0 [shape = 'u32[]', space=smem, size = 0x4, offset = 0x4, fixed_abs, tag = 'smem constant byte address 0x4 - core index']
  #allocation1 [shape = 'u32[144,128]{1,0:T(1,128)}', space=vmem, size = 0x12000, scoped, tag = 'internal scratch']
  #allocation2 [shape = 'f32[2,128]{1,0:T(2,128)}', space=vmem, size = 0x400, scoped, tag = 'scratch operand']
  #allocation13 [shape = 's32[]', space=sflag, size = 0x4, offset = 0, fixed_abs, tag = 'sflag constant byte address 0x0 - dummy sync flag']
  %s0 = inlined_call_operand.hbm [shape: bf16[2,256,36], index: 0, kind: input, shape index: {}]
  %s1 = inlined_call_operand.hbm [shape: bf16[36,128], index: 1, kind: input, shape index: {}]
  %s2 = inlined_call_operand.hbm [shape: f32[1,128], index: 2, kind: input, shape index: {}]
  %s3 = inlined_call_operand.hbm [shape: bf16[128,128], index: 3, kind: input, shape index: {}]
  %s4 = inlined_call_operand.hbm [shape: f32[1,128], index: 4, kind: input, shape index: {}]
  %s5 = inlined_call_operand.hbm [shape: f32[1,2,128], index: 5, kind: output, shape index: {}]
  %s6 = sld [smem:[#allocation0]]
  $region81: #{tpu_custom_call.1} parent=0
    _
  %s8 = ssub.s32 1, %s6
  %s9 = scalar_select 0, %s8, %s6
  $region1: #{tpu_custom_call.1} parent=0
    #allocation3 [shape = 'u8[131072]{0}', space=vmem, size = 0x20000, scoped, tag = 'input window, operand 0']
    #allocation4 [shape = 's32[2]{0}', space=sflag, size = 0x8, scoped, tag = 'scoped memory for tpu_custom_call.1']
    #allocation5 [shape = 's32[2]{0}', space=sflag, size = 0x8, scoped, tag = 'scoped memory for tpu_custom_call.1']
    #allocation6 [shape = 'u8[10240]{0}', space=vmem, size = 0x2800, scoped, tag = 'input window, operand 1, single buffered']
    #allocation7 [shape = 's32[1]{0}', space=sflag, size = 0x4, scoped, tag = 'scoped memory for tpu_custom_call.1']
    #allocation8 [shape = 'u8[512]{0}', space=vmem, size = 0x400, scoped, tag = 'input window, operand 2, single buffered']
    #allocation9 [shape = 'u8[32768]{0}', space=vmem, size = 0x8000, scoped, tag = 'input window, operand 3, single buffered']
    #allocation10 [shape = 's32[1]{0}', space=sflag, size = 0x4, scoped, tag = 'scoped memory for tpu_custom_call.1']
    #allocation11 [shape = 'u8[512]{0}', space=vmem, size = 0x400, scoped, tag = 'input window, operand 4, single buffered']
    #allocation12 [shape = 'u8[1024]{0}', space=vmem, size = 0x400, scoped, tag = 'output window, operand 0, single buffered']
    %10 = vsyncpa [#allocation4], 0
    %s11 = scalar_lea.sflag [#allocation4], 1
    %12 = vsyncpa %s11, 0
    %13 = vsyncpa [#allocation7], 0
    %14 = vsyncpa [#allocation10], 0
    %15 = vsyncpa [#allocation5], 0
    loop: start=0, step=1, limit=4
    $region2: #{tpu_custom_call.1} parent=1 // loop_pre_header
      _
    $region3: #{tpu_custom_call.1} parent=1 // loop_header
      %s17 = sphi 0, %s21
      %p18 = scmp.ge.s32.totalorder %s17, 4
      %s24 = sphi 0, %s36
      %s25 = sphi 0, %s32
      %s26 = sphi 0, %s24
      %s27 = sphi 0, %s25
      %s28 = sphi 0, %s26
      %s29 = sphi 0, %s27
      %s41 = sphi 0, %s43
      %s44 = sphi 0, %s41
      %s45 = sphi 0, %s44
      %s61 = sphi 0, %s45
      %s65 = sphi 0, %s65
      %s67 = sphi 0, %s65
      %s68 = sphi 0, %s67
      %s82 = sphi 0, %s68
      %s86 = sphi 0, %s86
      %s88 = sphi 0, %s86
      %s89 = sphi 0, %s88
      %s103 = sphi 0, %s89
      %s107 = sphi 0, %s107
      %s109 = sphi 0, %s107
      %s110 = sphi 0, %s109
      %s124 = sphi 0, %s110
      %s128 = sphi 0, %s128
      %s130 = sphi 0, %s128
      %s131 = sphi 0, %s130
      %s145 = sphi 0, %s131
      %s151 = sphi 0, %s153
      %s154 = sphi 0, %s151
      %s155 = sphi 0, %s154
      %s171 = sphi 0, %s155
    $region4: #{tpu_custom_call.1} parent=1 // loop_header_branch
      %20 = sbr.rel (%p18) target = $region8
    $region5: #{tpu_custom_call.1} parent=1 // loop_body
      %s22 = ssub.s32 %s17, 1
      %s23 = ssub.s32 %s17, 2
      %s30 = sadd.s32 1, %s25
      %p31 = scmp.ge.s32.totalorder %s30, 2
      %s32 = scalar_select %p31, 0, %s30
      %s33 = sadd.s32 1, %s24
      %s34 = scalar_select %p31, %s33, %s24
      %p35 = scmp.ge.s32.totalorder %s34, 1
      %s36 = scalar_select %p35, 0, %s34
      %s37 = ssub.s32 %s24, %s36
      %s38 = ssub.s32 %s25, %s32
      %s39 = sor.u32 %s37, %s38
      %p40 = scmp.eq.s32.totalorder %s39, 0
      %s42 = sadd.s32 %s41, 1
      %s43 = scalar_select %p40, %s41, %s42
      %p46 = pneg %p40
      %p47 = scmp.eq.s32.totalorder %s17, 1
      %p48 = por %p46, %p47
      %p49 = scmp.ne.s32.totalorder %s41, %s44
      %p50 = scmp.eq.s32.totalorder %s17, 0
      %p51 = por %p49, %p50
      %p52 = scmp.ne.s32.totalorder %s41, %s44
      %p53 = scmp.eq.s32.totalorder %s22, 1
      %p54 = por %p52, %p53
      %p55 = scmp.ne.s32.totalorder %s44, %s45
      %p56 = scmp.eq.s32.totalorder %s22, 0
      %p57 = por %p55, %p56
      %p58 = scmp.ne.s32.totalorder %s44, %s45
      %p59 = scmp.eq.s32.totalorder %s23, 1
      %p60 = por %p58, %p59
      %p62 = scmp.ne.s32.totalorder %s45, %s61
      %p63 = scmp.eq.s32.totalorder %s23, 0
      %p64 = por %p62, %p63
      %s66 = sadd.s32 %s65, 1
      %p69 = scmp.eq.s32.totalorder %s17, 1
      %p70 = scmp.ne.s32.totalorder %s65, %s67
      %p71 = scmp.eq.s32.totalorder %s17, 0
      %p72 = por %p70, %p71
      %p73 = scmp.ne.s32.totalorder %s65, %s67
      %p74 = scmp.eq.s32.totalorder %s22, 1
      %p75 = por %p73, %p74
      %p76 = scmp.ne.s32.totalorder %s67, %s68
      %p77 = scmp.eq.s32.totalorder %s22, 0
      %p78 = por %p76, %p77
      %p79 = scmp.ne.s32.totalorder %s67, %s68
      %p80 = scmp.eq.s32.totalorder %s23, 1
      %p81 = por %p79, %p80
      %p83 = scmp.ne.s32.totalorder %s68, %s82
      %p84 = scmp.eq.s32.totalorder %s23, 0
      %p85 = por %p83, %p84
      %s87 = sadd.s32 %s86, 1
      %p90 = scmp.eq.s32.totalorder %s17, 1
      %p91 = scmp.ne.s32.totalorder %s86, %s88
      %p92 = scmp.eq.s32.totalorder %s17, 0
      %p93 = por %p91, %p92
      %p94 = scmp.ne.s32.totalorder %s86, %s88
      %p95 = scmp.eq.s32.totalorder %s22, 1
      %p96 = por %p94, %p95
      %p97 = scmp.ne.s32.totalorder %s88, %s89
      %p98 = scmp.eq.s32.totalorder %s22, 0
      %p99 = por %p97, %p98
      %p100 = scmp.ne.s32.totalorder %s88, %s89
      %p101 = scmp.eq.s32.totalorder %s23, 1
      %p102 = por %p100, %p101
      %p104 = scmp.ne.s32.totalorder %s89, %s103
      %p105 = scmp.eq.s32.totalorder %s23, 0
      %p106 = por %p104, %p105
      %s108 = sadd.s32 %s107, 1
      %p111 = scmp.eq.s32.totalorder %s17, 1
      %p112 = scmp.ne.s32.totalorder %s107, %s109
      %p113 = scmp.eq.s32.totalorder %s17, 0
      %p114 = por %p112, %p113
      %p115 = scmp.ne.s32.totalorder %s107, %s109
      %p116 = scmp.eq.s32.totalorder %s22, 1
      %p117 = por %p115, %p116
      %p118 = scmp.ne.s32.totalorder %s109, %s110
      %p119 = scmp.eq.s32.totalorder %s22, 0
      %p120 = por %p118, %p119
      %p121 = scmp.ne.s32.totalorder %s109, %s110
      %p122 = scmp.eq.s32.totalorder %s23, 1
      %p123 = por %p121, %p122
      %p125 = scmp.ne.s32.totalorder %s110, %s124
      %p126 = scmp.eq.s32.totalorder %s23, 0
      %p127 = por %p125, %p126
      %s129 = sadd.s32 %s128, 1
      %p132 = scmp.eq.s32.totalorder %s17, 1
      %p133 = scmp.ne.s32.totalorder %s128, %s130
      %p134 = scmp.eq.s32.totalorder %s17, 0
      %p135 = por %p133, %p134
      %p136 = scmp.ne.s32.totalorder %s128, %s130
      %p137 = scmp.eq.s32.totalorder %s22, 1
      %p138 = por %p136, %p137
      %p139 = scmp.ne.s32.totalorder %s130, %s131
      %p140 = scmp.eq.s32.totalorder %s22, 0
      %p141 = por %p139, %p140
      %p142 = scmp.ne.s32.totalorder %s130, %s131
      %p143 = scmp.eq.s32.totalorder %s23, 1
      %p144 = por %p142, %p143
      %p146 = scmp.ne.s32.totalorder %s131, %s145
      %p147 = scmp.eq.s32.totalorder %s23, 0
      %p148 = por %p146, %p147
      %s149 = ssub.s32 %s24, %s36
      %p150 = scmp.eq.s32.totalorder %s149, 0
      %s152 = sadd.s32 %s151, 1
      %s153 = scalar_select %p150, %s151, %s152
      %p156 = pneg %p150
      %p157 = scmp.eq.s32.totalorder %s17, 1
      %p158 = por %p156, %p157
      %p159 = scmp.ne.s32.totalorder %s151, %s154
      %p160 = scmp.eq.s32.totalorder %s17, 0
      %p161 = por %p159, %p160
      %p162 = scmp.ne.s32.totalorder %s151, %s154
      %p163 = scmp.eq.s32.totalorder %s22, 1
      %p164 = por %p162, %p163
      %p165 = scmp.ne.s32.totalorder %s154, %s155
      %p166 = scmp.eq.s32.totalorder %s22, 0
      %p167 = por %p165, %p166
      %p168 = scmp.ne.s32.totalorder %s154, %s155
      %p169 = scmp.eq.s32.totalorder %s23, 1
      %p170 = por %p168, %p169
      %p172 = scmp.ne.s32.totalorder %s155, %s171
      %p173 = scmp.eq.s32.totalorder %s23, 0
      %p174 = por %p172, %p173
      %p175 = scmp.le.s32.totalorder 1, %s17
      %p176 = scmp.lt.s32.totalorder %s17, 3
      %p177 = pnand %p175, %p176
      %p178 = pneg %p177
      // Predicated region
      $region9: #{tpu_custom_call.1} parent=5 // pred_check
        _
      $region10: #{tpu_custom_call.1} parent=5 // pred_check_branch
        %180 = sbr.rel (%p177) target = $region12
      $region11: #{tpu_custom_call.1} parent=5 // pred_region
        %s181 = ssub.s32 %s17, 1
        // Predicated region
        $region13: #{tpu_custom_call.1} parent=11 // pred_check
          %p182 = pneg %p78
        $region14: #{tpu_custom_call.1} parent=11 // pred_check_branch
          %184 = sbr.rel (%p182) target = $region16
        $region15: #{tpu_custom_call.1} parent=11 // pred_region
          %s186 = ssub.s32 320, 320
          %187 = vsyncadd [#allocation7], %s186
          %s188 = sshll.u32 [#allocation6], 4
          %s189 = int_to_ptr.vmem [resolvable:$true] %s188
          %194 = dma.hbm_to_vmem [thread:$0]  %s1, 320, %s189, [#allocation7], 64, 64, 4
        $region16: #{tpu_custom_call.1} parent=11 // pred_fallthru
          _
        // Predicated region
        $region17: #{tpu_custom_call.1} parent=11 // pred_check
          %p195 = pneg %p99
        $region18: #{tpu_custom_call.1} parent=11 // pred_check_branch
          %197 = sbr.rel (%p195) target = $region20
        $region19: #{tpu_custom_call.1} parent=11 // pred_region
          %s199 = ssub.s32 16, 16
          %200 = vsyncadd [#allocation7], %s199
          %s202 = sshll.u32 [#allocation8], 4
          %s203 = int_to_ptr.vmem [resolvable:$true] %s202
          %205 = dma.hbm_to_vmem [thread:$0]  %s2, 16, %s203, [#allocation7]
        $region20: #{tpu_custom_call.1} parent=11 // pred_fallthru
          _
        // Predicated region
        $region21: #{tpu_custom_call.1} parent=11 // pred_check
          %p206 = pneg %p120
        $region22: #{tpu_custom_call.1} parent=11 // pred_check_branch
          %208 = sbr.rel (%p206) target = $region24
        $region23: #{tpu_custom_call.1} parent=11 // pred_region
          %s210 = ssub.s32 1024, 1024
          %211 = vsyncadd [#allocation10], %s210
          %s212 = sshll.u32 [#allocation9], 4
          %s213 = int_to_ptr.vmem [resolvable:$true] %s212
          %218 = dma.hbm_to_vmem [thread:$0]  %s3, 1024, %s213, [#allocation10], 64, 64, 4
        $region24: #{tpu_custom_call.1} parent=11 // pred_fallthru
          _
        // Predicated region
        $region25: #{tpu_custom_call.1} parent=11 // pred_check
          %p219 = pneg %p141
        $region26: #{tpu_custom_call.1} parent=11 // pred_check_branch
          %221 = sbr.rel (%p219) target = $region28
        $region27: #{tpu_custom_call.1} parent=11 // pred_region
          %s223 = ssub.s32 16, 16
          %224 = vsyncadd [#allocation10], %s223
          %s226 = sshll.u32 [#allocation11], 4
          %s227 = int_to_ptr.vmem [resolvable:$true] %s226
          %229 = dma.hbm_to_vmem [thread:$0]  %s4, 16, %s227, [#allocation10]
        $region28: #{tpu_custom_call.1} parent=11 // pred_fallthru
          _
      $region12: #{tpu_custom_call.1} parent=5 // pred_fallthru
        _
      %p230 = scmp.lt.s32.totalorder %s17, 2
      // Predicated region
      $region29: #{tpu_custom_call.1} parent=5 // pred_check
        %p231 = pneg %p230
      $region30: #{tpu_custom_call.1} parent=5 // pred_check_branch
        %233 = sbr.rel (%p231) target = $region32
      $region31: #{tpu_custom_call.1} parent=5 // pred_region
        // Predicated region
        $region33: #{tpu_custom_call.1} parent=31 // pred_check
          %p234 = pneg %p51
        $region34: #{tpu_custom_call.1} parent=31 // pred_check_branch
          %236 = sbr.rel (%p234) target = $region36
        $region35: #{tpu_custom_call.1} parent=31 // pred_region
          #allocation14 [shape = 'u32[6]{0}', space=smem, size = 0x18, scoped, tag = 'DMA stride descriptor']
          %s237 = sand.u32 %s41, 1
          %s238 = scalar_lea.sflag [#allocation4], %s237
          %s239 = sand.u32 %s41, 1
          %s240 = smul.addr %s239, 128
          %s241 = scalar_lea.vmem [#allocation3], %s240
          %s242 = smul.u32 2, %s24
          %s243 = smul.u32 16, %s25
          %s245 = ssub.s32 2048, 2048
          %246 = vsyncadd %s238, %s245
          %s247 = smul.addr %s242, 32
          %s248 = sadd.s32 %s243, %s247
          %s249 = smul.addr %s248, 64
          %s250 = scalar_lea.hbm %s0, %s249
          %s252 = sshll.u32 1, 14
          %s253 = sxor.u32 4294967295, %s252
          %s255 = sld [smem:[#allocation0]]
          %s256 = sadd.s32 2, %s255
          %s258 = sshll.u32 7, 26
          %s259 = sxor.u32 4294967295, %s258
          %s260 = sand.u32 0, %s259
          %s261 = sshll.u32 %s256, 26
          %s262 = sor.u32 %s260, %s261
          %s263 = sshll.u32 %s241, 4
          %s264 = int_to_ptr.vmem [resolvable:$true] %s263
          %270 = sst [smem:[#allocation14]] 2048
          %s271 = scalar_lea.smem [#allocation14], 1
          %272 = sst [smem:[%s271]] 1024
          %s273 = scalar_lea.smem [#allocation14], 2
          %274 = sst [smem:[%s273]] 16
          %s275 = scalar_lea.smem [#allocation14], 3
          %276 = sst [smem:[%s275]] 64
          %s277 = scalar_lea.smem [#allocation14], 4
          %278 = sst [smem:[%s277]] 64
          %s279 = scalar_lea.smem [#allocation14], 5
          %280 = sst [smem:[%s279]] 4
          %282 = dma.general %s250, 2048, %s264, %s238, [#allocation13], [#allocation14], %s262, 0
        $region36: #{tpu_custom_call.1} parent=31 // pred_fallthru
          _
      $region32: #{tpu_custom_call.1} parent=5 // pred_fallthru
        _
      %p283 = scmp.le.s32.totalorder 1, %s17
      %p284 = scmp.lt.s32.totalorder %s17, 3
      %p285 = pnand %p283, %p284
      %p286 = pneg %p285
      // Predicated region
      $region37: #{tpu_custom_call.1} parent=5 // pred_check
        _
      $region38: #{tpu_custom_call.1} parent=5 // pred_check_branch
        %288 = sbr.rel (%p285) target = $region40
      $region39: #{tpu_custom_call.1} parent=5 // pred_region
        %s289 = ssub.s32 %s17, 1
        %s290 = sand.u32 %s44, 1
        %s291 = scalar_lea.sflag [#allocation4], %s290
        %s292 = sand.u32 %s44, 1
        %s293 = smul.addr %s292, 128
        %s294 = scalar_lea.vmem [#allocation3], %s293
        // Predicated region
        $region41: #{tpu_custom_call.1} parent=39 // pred_check
          %p295 = pneg %p57
        $region42: #{tpu_custom_call.1} parent=39 // pred_check_branch
          %297 = sbr.rel (%p295) target = $region44
        $region43: #{tpu_custom_call.1} parent=39 // pred_region
          %298 = dma.done %s291, 2048
        $region44: #{tpu_custom_call.1} parent=39 // pred_fallthru
          _
        // Predicated region
        $region45: #{tpu_custom_call.1} parent=39 // pred_check
          %p299 = pneg %p78
        $region46: #{tpu_custom_call.1} parent=39 // pred_check_branch
          %301 = sbr.rel (%p299) target = $region48
        $region47: #{tpu_custom_call.1} parent=39 // pred_region
          %302 = dma.done [#allocation7], 320
        $region48: #{tpu_custom_call.1} parent=39 // pred_fallthru
          _
        // Predicated region
        $region49: #{tpu_custom_call.1} parent=39 // pred_check
          %p303 = pneg %p99
        $region50: #{tpu_custom_call.1} parent=39 // pred_check_branch
          %305 = sbr.rel (%p303) target = $region52
        $region51: #{tpu_custom_call.1} parent=39 // pred_region
          %306 = dma.done [#allocation7], 16
        $region52: #{tpu_custom_call.1} parent=39 // pred_fallthru
          _
        // Predicated region
        $region53: #{tpu_custom_call.1} parent=39 // pred_check
          %p307 = pneg %p120
        $region54: #{tpu_custom_call.1} parent=39 // pred_check_branch
          %309 = sbr.rel (%p307) target = $region56
        $region55: #{tpu_custom_call.1} parent=39 // pred_region
          %310 = dma.done [#allocation10], 1024
        $region56: #{tpu_custom_call.1} parent=39 // pred_fallthru
          _
        // Predicated region
        $region57: #{tpu_custom_call.1} parent=39 // pred_check
          %p311 = pneg %p141
        $region58: #{tpu_custom_call.1} parent=39 // pred_check_branch
          %313 = sbr.rel (%p311) target = $region60
        $region59: #{tpu_custom_call.1} parent=39 // pred_region
          %314 = dma.done [#allocation10], 16
        $region60: #{tpu_custom_call.1} parent=39 // pred_fallthru
          _
        %s315 = sand.u32 %s44, 1
        %s316 = scalar_lea.sflag [#allocation4], %s315
        %s317 = sand.u32 %s44, 1
        %s318 = smul.addr %s317, 128
        %s319 = scalar_lea.vmem [#allocation3], %s318
        %p320 = pneg %p57
        %p321 = pneg %p54
        %p322 = pneg %p78
        %p323 = pneg %p75
        %p324 = pneg %p99
        %p325 = pneg %p96
        %p326 = pneg %p120
        %p327 = pneg %p117
        %p328 = pneg %p141
        %p329 = pneg %p138
        %p330 = pneg %p167
        %p331 = pneg %p164
        %s332 = smul.u32 2, %s26
        %s333 = smul.u32 16, %s27
        %p335 = scmp.eq.s32.totalorder %s27, 0
        // Predicated region
        $region61: #{tpu_custom_call.1} parent=39 // pred_check
          %p336 = pneg %p335
        $region62: #{tpu_custom_call.1} parent=39 // pred_check_branch
          %338 = sbr.rel (%p336) target = $region64
        $region63: #{tpu_custom_call.1} parent=39 // pred_region
          %339 = vst [vmem:[#allocation2] sm:$0x3] 0.0
        $region64: #{tpu_custom_call.1} parent=39 // pred_fallthru
          _
        %v340 = vld [vmem:[%s294] sm:$0xf]
        %v341 = vld [vmem:[%s294 + $0x4] sm:$0xf]
        %v342 = vld [vmem:[%s294 + $0x8] sm:$0xf]
        %v343 = vld [vmem:[%s294 + $0xc] sm:$0xf]
        %v344 = vld [vmem:[%s294 + $0x10] sm:$0xf]
        %v345 = vld [vmem:[%s294 + $0x14] sm:$0xf]
        %v346 = vld [vmem:[%s294 + $0x18] sm:$0xf]
        %v347 = vld [vmem:[%s294 + $0x1c] sm:$0xf]
        %v348 = vld [vmem:[%s294 + $0x20] sm:$0xf]
        %v349 = vld [vmem:[%s294 + $0x24] sm:$0xf]
        %v350 = vld [vmem:[%s294 + $0x28] sm:$0xf]
        %v351 = vld [vmem:[%s294 + $0x2c] sm:$0xf]
        %v352 = vld [vmem:[%s294 + $0x30] sm:$0xf]
        %v353 = vld [vmem:[%s294 + $0x34] sm:$0xf]
        %v354 = vld [vmem:[%s294 + $0x38] sm:$0xf]
        %v355 = vld [vmem:[%s294 + $0x3c] sm:$0xf]
        %v356 = vld [vmem:[%s294 + $0x40] sm:$0xf]
        %v357 = vld [vmem:[%s294 + $0x44] sm:$0xf]
        %v358 = vld [vmem:[%s294 + $0x48] sm:$0xf]
        %v359 = vld [vmem:[%s294 + $0x4c] sm:$0xf]
        %v360 = vld [vmem:[%s294 + $0x50] sm:$0xf]
        %v361 = vld [vmem:[%s294 + $0x54] sm:$0xf]
        %v362 = vld [vmem:[%s294 + $0x58] sm:$0xf]
        %v363 = vld [vmem:[%s294 + $0x5c] sm:$0xf]
        %v364 = vld [vmem:[%s294 + $0x60] sm:$0xf]
        %v365 = vld [vmem:[%s294 + $0x64] sm:$0xf]
        %v366 = vld [vmem:[%s294 + $0x68] sm:$0xf]
        %v367 = vld [vmem:[%s294 + $0x6c] sm:$0xf]
        %v368 = vld [vmem:[%s294 + $0x70] sm:$0xf]
        %v369 = vld [vmem:[%s294 + $0x74] sm:$0xf]
        %v370 = vld [vmem:[%s294 + $0x78] sm:$0xf]
        %v371 = vld [vmem:[%s294 + $0x7c] sm:$0xf]
        %v372 = vld [vmem:[#allocation6] sm:$0xf]
        %v373 = vld [vmem:[#allocation6 + $0x4] sm:$0xf]
        %v374 = vld [vmem:[#allocation6 + $0x8] sm:$0xf]
        %v375 = vld [vmem:[#allocation6 + $0xc] sm:$0xf]
        %v376 = vld [vmem:[#allocation6 + $0x10] sm:$0x3]
        %v377 = vld [vmem:[#allocation8] sm:$0x1]
        %v379 = vlaneseq
        %v380 = vshrl.u32 %v379, 7
        %v381 = vsub.s32 0, %v380
        %v382 = vrot.slane %v377, %v381
        %v416 = vunpack.c.l.b16 %v340
        %v417 = vunpack.c.l.b16 %v341
        %v418 = vunpack.c.l.b16 %v342
        %v419 = vunpack.c.l.b16 %v343
        %v420 = vunpack.c.l.b16 %v344
        %v421 = vunpack.c.l.b16 %v345
        %v422 = vunpack.c.l.b16 %v346
        %v423 = vunpack.c.l.b16 %v347
        %v424 = vunpack.c.l.b16 %v348
        %v425 = vunpack.c.l.b16 %v349
        %v426 = vunpack.c.l.b16 %v350
        %v427 = vunpack.c.l.b16 %v351
        %v428 = vunpack.c.l.b16 %v352
        %v429 = vunpack.c.l.b16 %v353
        %v430 = vunpack.c.l.b16 %v354
        %v431 = vunpack.c.l.b16 %v355
        %v432 = vunpack.c.l.b16 %v356
        %v433 = vunpack.c.l.b16 %v357
        %v434 = vunpack.c.l.b16 %v358
        %v435 = vunpack.c.l.b16 %v359
        %v436 = vunpack.c.l.b16 %v360
        %v437 = vunpack.c.l.b16 %v361
        %v438 = vunpack.c.l.b16 %v362
        %v439 = vunpack.c.l.b16 %v363
        %v440 = vunpack.c.l.b16 %v364
        %v441 = vunpack.c.l.b16 %v365
        %v442 = vunpack.c.l.b16 %v366
        %v443 = vunpack.c.l.b16 %v367
        %v444 = vunpack.c.l.b16 %v368
        %v445 = vunpack.c.l.b16 %v369
        %v446 = vunpack.c.l.b16 %v370
        %v447 = vunpack.c.l.b16 %v371
        %v448 = vpack.c.b16 %v417, %v416
        %v449 = vpack.c.b16 %v419, %v418
        %v450 = vpack.c.b16 %v421, %v420
        %v451 = vpack.c.b16 %v423, %v422
        %v452 = vpack.c.b16 %v425, %v424
        %v453 = vpack.c.b16 %v427, %v426
        %v454 = vpack.c.b16 %v429, %v428
        %v455 = vpack.c.b16 %v431, %v430
        %v456 = vpack.c.b16 %v433, %v432
        %v457 = vpack.c.b16 %v435, %v434
        %v458 = vpack.c.b16 %v437, %v436
        %v459 = vpack.c.b16 %v439, %v438
        %v460 = vpack.c.b16 %v441, %v440
        %v461 = vpack.c.b16 %v443, %v442
        %v462 = vpack.c.b16 %v445, %v444
        %v463 = vpack.c.b16 %v447, %v446
        %v469 = vunpack.c.l.b16 %v372
        %v470 = vunpack.c.l.b16 %v373
        %v471 = vunpack.c.l.b16 %v374
        %v472 = vunpack.c.l.b16 %v375
        %v473 = vunpack.c.l.b16 %v376
        %v474 = vpack.c.b16 %v470, %v469
        %v475 = vpack.c.b16 %v472, %v471
        %v476 = vpack.c.b16 %v473, %v473
        %vm479 = vcmask 293888
        %v481 = vsel %vm479, %v448, 0
        %v484 = vsel %vm479, %v449, 0
        %v487 = vsel %vm479, %v450, 0
        %v490 = vsel %vm479, %v451, 0
        %v493 = vsel %vm479, %v452, 0
        %v496 = vsel %vm479, %v453, 0
        %v499 = vsel %vm479, %v454, 0
        %v502 = vsel %vm479, %v455, 0
        %v505 = vsel %vm479, %v456, 0
        %v508 = vsel %vm479, %v457, 0
        %v511 = vsel %vm479, %v458, 0
        %v514 = vsel %vm479, %v459, 0
        %v517 = vsel %vm479, %v460, 0
        %v520 = vsel %vm479, %v461, 0
        %v523 = vsel %vm479, %v462, 0
        %v526 = vsel %vm479, %v463, 0
        %vm528 = vcmask 1041408
        %v530 = vsel %vm528, %v476, 0
        %532 = vmatprep.subr.bf16.mxu0 0
        %533 = vmatpush1.bf16.msra.mxu0 %v474
        %534 = vmatprep.subr.bf16.mxu0 0
        %535 = vmatpush1.bf16.msra.mxu0 %v475
        %536 = vmatprep.subr.bf16.mxu0 0
        %537 = vmatpush1.bf16.msra.mxu0 %v530
        %538 = vmatprep.subr.bf16.mxu0 0
        %539 = vmatpush1.bf16.msra.mxu0 0
        %540 = vmatprep.subr.bf16.mxu0 0
        %541 = vmatpush1.bf16.msra.mxu0 0
        %542 = vmatprep.subr.bf16.mxu0 0
        %543 = vmatpush1.bf16.msra.mxu0 0
        %544 = vmatprep.subr.bf16.mxu0 0
        %545 = vmatpush1.bf16.msra.mxu0 0
        %546 = vmatprep.subr.bf16.mxu0 0
        %547 = vmatpush1.bf16.msra.mxu0 0
        %548 = vmatprep.subr.bf16.mxu0 0
        %549 = vmatpush1.bf16.msra.mxu0 0
        %550 = vmatprep.subr.bf16.mxu0 0
        %551 = vmatpush1.bf16.msra.mxu0 0
        %552 = vmatprep.subr.bf16.mxu0 0
        %553 = vmatpush1.bf16.msra.mxu0 0
        %554 = vmatprep.subr.bf16.mxu0 0
        %555 = vmatpush1.bf16.msra.mxu0 0
        %556 = vmatprep.subr.bf16.mxu0 0
        %557 = vmatpush1.bf16.msra.mxu0 0
        %558 = vmatprep.subr.bf16.mxu0 0
        %559 = vmatpush1.bf16.msra.mxu0 0
        %560 = vmatprep.subr.bf16.mxu0 0
        %561 = vmatpush1.bf16.msra.mxu0 0
        %562 = vmatprep.subr.bf16.mxu0 0
        %563 = vmatpush1.bf16.msra.mxu0 0
        %564 = vmatprep.mubr.bf16.mxu0 0
        %565 = vmatmul.mubr.bf16.gmra.mrb[0].mxu0 %v481
        %v566 = vpop.f32.mrb[0].mxu0
        %v567 = vadd.f32 %v382, %v566
        %v568 = vpop.f32.mrb[0].mxu0
        %v569 = vpop.f32.mrb[0].mxu0
        %v570 = vadd.f32 %v382, %v569
        %v571 = vpop.f32.mrb[0].mxu0
        %572 = vmatprep.mubr.bf16.mxu0 0
        %573 = vmatmul.mubr.bf16.gmra.mrb[0].mxu0 %v484
        %v574 = vpop.f32.mrb[0].mxu0
        %v575 = vadd.f32 %v382, %v574
        %v576 = vpop.f32.mrb[0].mxu0
        %v577 = vpop.f32.mrb[0].mxu0
        %v578 = vadd.f32 %v382, %v577
        %v579 = vpop.f32.mrb[0].mxu0
        %580 = vmatprep.mubr.bf16.mxu0 0
        %581 = vmatmul.mubr.bf16.gmra.mrb[0].mxu0 %v487
        %v582 = vpop.f32.mrb[0].mxu0
        %v583 = vadd.f32 %v382, %v582
        %v584 = vpop.f32.mrb[0].mxu0
        %v585 = vpop.f32.mrb[0].mxu0
        %v586 = vadd.f32 %v382, %v585
        %v587 = vpop.f32.mrb[0].mxu0
        %588 = vmatprep.mubr.bf16.mxu0 0
        %589 = vmatmul.mubr.bf16.gmra.mrb[0].mxu0 %v490
        %v590 = vpop.f32.mrb[0].mxu0
        %v591 = vadd.f32 %v382, %v590
        %v592 = vpop.f32.mrb[0].mxu0
        %v593 = vpop.f32.mrb[0].mxu0
        %v594 = vadd.f32 %v382, %v593
        %v595 = vpop.f32.mrb[0].mxu0
        %596 = vmatprep.mubr.bf16.mxu0 0
        %597 = vmatmul.mubr.bf16.gmra.mrb[0].mxu0 %v493
        %v598 = vpop.f32.mrb[0].mxu0
        %v599 = vadd.f32 %v382, %v598
        %v600 = vpop.f32.mrb[0].mxu0
        %v601 = vpop.f32.mrb[0].mxu0
        %v602 = vadd.f32 %v382, %v601
        %v603 = vpop.f32.mrb[0].mxu0
        %604 = vmatprep.mubr.bf16.mxu0 0
        %605 = vmatmul.mubr.bf16.gmra.mrb[0].mxu0 %v496
        %v606 = vpop.f32.mrb[0].mxu0
        %v607 = vadd.f32 %v382, %v606
        %v608 = vpop.f32.mrb[0].mxu0
        %v609 = vpop.f32.mrb[0].mxu0
        %v610 = vadd.f32 %v382, %v609
        %v611 = vpop.f32.mrb[0].mxu0
        %612 = vmatprep.mubr.bf16.mxu0 0
        %613 = vmatmul.mubr.bf16.gmra.mrb[0].mxu0 %v499
        %v614 = vpop.f32.mrb[0].mxu0
        %v615 = vadd.f32 %v382, %v614
        %v616 = vpop.f32.mrb[0].mxu0
        %v617 = vpop.f32.mrb[0].mxu0
        %v618 = vadd.f32 %v382, %v617
        %v619 = vpop.f32.mrb[0].mxu0
        %620 = vmatprep.mubr.bf16.mxu0 0
        %621 = vmatmul.mubr.bf16.gmra.mrb[0].mxu0 %v502
        %v622 = vpop.f32.mrb[0].mxu0
        %v623 = vadd.f32 %v382, %v622
        %v624 = vpop.f32.mrb[0].mxu0
        %v625 = vpop.f32.mrb[0].mxu0
        %v626 = vadd.f32 %v382, %v625
        %v627 = vpop.f32.mrb[0].mxu0
        %628 = vmatprep.mubr.bf16.mxu0 0
        %629 = vmatmul.mubr.bf16.gmra.mrb[0].mxu0 %v505
        %v630 = vpop.f32.mrb[0].mxu0
        %v631 = vadd.f32 %v382, %v630
        %v632 = vpop.f32.mrb[0].mxu0
        %v633 = vpop.f32.mrb[0].mxu0
        %v634 = vadd.f32 %v382, %v633
        %v635 = vpop.f32.mrb[0].mxu0
        %636 = vmatprep.mubr.bf16.mxu0 0
        %637 = vmatmul.mubr.bf16.gmra.mrb[0].mxu0 %v508
        %v638 = vpop.f32.mrb[0].mxu0
        %v639 = vadd.f32 %v382, %v638
        %v640 = vpop.f32.mrb[0].mxu0
        %v641 = vpop.f32.mrb[0].mxu0
        %v642 = vadd.f32 %v382, %v641
        %v643 = vpop.f32.mrb[0].mxu0
        %644 = vmatprep.mubr.bf16.mxu0 0
        %645 = vmatmul.mubr.bf16.gmra.mrb[0].mxu0 %v511
        %v646 = vpop.f32.mrb[0].mxu0
        %v647 = vadd.f32 %v382, %v646
        %v648 = vpop.f32.mrb[0].mxu0
        %v649 = vpop.f32.mrb[0].mxu0
        %v650 = vadd.f32 %v382, %v649
        %v651 = vpop.f32.mrb[0].mxu0
        %652 = vmatprep.mubr.bf16.mxu0 0
        %653 = vmatmul.mubr.bf16.gmra.mrb[0].mxu0 %v514
        %v654 = vpop.f32.mrb[0].mxu0
        %v655 = vadd.f32 %v382, %v654
        %v656 = vpop.f32.mrb[0].mxu0
        %v657 = vpop.f32.mrb[0].mxu0
        %v658 = vadd.f32 %v382, %v657
        %v659 = vpop.f32.mrb[0].mxu0
        %660 = vmatprep.mubr.bf16.mxu0 0
        %661 = vmatmul.mubr.bf16.gmra.mrb[0].mxu0 %v517
        %v662 = vpop.f32.mrb[0].mxu0
        %v663 = vadd.f32 %v382, %v662
        %v664 = vpop.f32.mrb[0].mxu0
        %v665 = vpop.f32.mrb[0].mxu0
        %v666 = vadd.f32 %v382, %v665
        %v667 = vpop.f32.mrb[0].mxu0
        %668 = vmatprep.mubr.bf16.mxu0 0
        %669 = vmatmul.mubr.bf16.gmra.mrb[0].mxu0 %v520
        %v670 = vpop.f32.mrb[0].mxu0
        %v671 = vadd.f32 %v382, %v670
        %v672 = vpop.f32.mrb[0].mxu0
        %v673 = vpop.f32.mrb[0].mxu0
        %v674 = vadd.f32 %v382, %v673
        %v675 = vpop.f32.mrb[0].mxu0
        %676 = vmatprep.mubr.bf16.mxu0 0
        %677 = vmatmul.mubr.bf16.gmra.mrb[0].mxu0 %v523
        %v678 = vpop.f32.mrb[0].mxu0
        %v679 = vadd.f32 %v382, %v678
        %v680 = vpop.f32.mrb[0].mxu0
        %v681 = vpop.f32.mrb[0].mxu0
        %v682 = vadd.f32 %v382, %v681
        %v683 = vpop.f32.mrb[0].mxu0
        %684 = vmatprep.mubr.bf16.mxu0 0
        %685 = vmatmul.mubr.bf16.gmra.mrb[0].mxu0 %v526
        %v686 = vpop.f32.mrb[0].mxu0
        %v687 = vadd.f32 %v382, %v686
        %v688 = vpop.f32.mrb[0].mxu0
        %v689 = vpop.f32.mrb[0].mxu0
        %v690 = vadd.f32 %v382, %v689
        %v691 = vpop.f32.mrb[0].mxu0
        %692 = vdwg.mxu0
        %v693 = vmax.f32 %v567, 0.0
        %v694 = vmax.f32 %v570, 0.0
        %v695 = vmax.f32 %v575, 0.0
        %v696 = vmax.f32 %v578, 0.0
        %v697 = vmax.f32 %v583, 0.0
        %v698 = vmax.f32 %v586, 0.0
        %v699 = vmax.f32 %v591, 0.0
        %v700 = vmax.f32 %v594, 0.0
        %v701 = vmax.f32 %v599, 0.0
        %v702 = vmax.f32 %v602, 0.0
        %v703 = vmax.f32 %v607, 0.0
        %v704 = vmax.f32 %v610, 0.0
        %v705 = vmax.f32 %v615, 0.0
        %v706 = vmax.f32 %v618, 0.0
        %v707 = vmax.f32 %v623, 0.0
        %v708 = vmax.f32 %v626, 0.0
        %v709 = vmax.f32 %v631, 0.0
        %v710 = vmax.f32 %v634, 0.0
        %v711 = vmax.f32 %v639, 0.0
        %v712 = vmax.f32 %v642, 0.0
        %v713 = vmax.f32 %v647, 0.0
        %v714 = vmax.f32 %v650, 0.0
        %v715 = vmax.f32 %v655, 0.0
        %v716 = vmax.f32 %v658, 0.0
        %v717 = vmax.f32 %v663, 0.0
        %v718 = vmax.f32 %v666, 0.0
        %v719 = vmax.f32 %v671, 0.0
        %v720 = vmax.f32 %v674, 0.0
        %v721 = vmax.f32 %v679, 0.0
        %v722 = vmax.f32 %v682, 0.0
        %v723 = vmax.f32 %v687, 0.0
        %v724 = vmax.f32 %v690, 0.0
        %v725 = vld [vmem:[#allocation2] sm:$0x3]
        %v726 = vadd.f32 %v693, %v694
        %v727 = vadd.f32 %v726, %v695
        %v728 = vadd.f32 %v727, %v696
        %v729 = vadd.f32 %v728, %v697
        %v730 = vadd.f32 %v729, %v698
        %v731 = vadd.f32 %v730, %v699
        %v732 = vadd.f32 %v731, %v700
        %v733 = vadd.f32 %v732, %v701
        %v734 = vadd.f32 %v733, %v702
        %v735 = vadd.f32 %v734, %v703
        %v736 = vadd.f32 %v735, %v704
        %v737 = vadd.f32 %v736, %v705
        %v738 = vadd.f32 %v737, %v706
        %v739 = vadd.f32 %v738, %v707
        %v740 = vadd.f32 %v739, %v708
        %v741 = vrot.slane %v740, 4
        %v742 = vadd.f32 %v740, %v741
        %v743 = vrot.slane %v742, 2
        %v744 = vadd.f32 %v742, %v743
        %v745 = vrot.slane %v744, 1
        %v746 = vadd.f32 %v744, %v745
        %v747 = vadd.f32 %v709, %v710
        %v748 = vadd.f32 %v747, %v711
        %v749 = vadd.f32 %v748, %v712
        %v750 = vadd.f32 %v749, %v713
        %v751 = vadd.f32 %v750, %v714
        %v752 = vadd.f32 %v751, %v715
        %v753 = vadd.f32 %v752, %v716
        %v754 = vadd.f32 %v753, %v717
        %v755 = vadd.f32 %v754, %v718
        %v756 = vadd.f32 %v755, %v719
        %v757 = vadd.f32 %v756, %v720
        %v758 = vadd.f32 %v757, %v721
        %v759 = vadd.f32 %v758, %v722
        %v760 = vadd.f32 %v759, %v723
        %v761 = vadd.f32 %v760, %v724
        %v762 = vrot.slane %v761, 4
        %v763 = vadd.f32 %v761, %v762
        %v764 = vrot.slane %v763, 2
        %v765 = vadd.f32 %v763, %v764
        %v766 = vrot.slane %v765, 1
        %v767 = vadd.f32 %v765, %v766
        %vm770 = vcmask 1041409
        %v771 = vsel %vm770, %v767, %v746
        %v773 = vadd.f32 %v725, %v771
        %774 = vst [vmem:[#allocation2] sm:$0x3] %v773
        %p775 = scmp.eq.s32.totalorder %s27, 1
        // Predicated region
        $region65: #{tpu_custom_call.1} parent=39 // pred_check
          %p776 = pneg %p775
        $region66: #{tpu_custom_call.1} parent=39 // pred_check_branch
          %778 = sbr.rel (%p776) target = $region68
        $region67: #{tpu_custom_call.1} parent=39 // pred_region
          %v779 = vld [vmem:[#allocation2] sm:$0x3]
          %v780 = vmul.f32 %v779, 0.00390625
          %v781 = vpack.c.bf16 %v780, %v780
          %v782 = vld [vmem:[#allocation9] sm:$0xf]
          %v783 = vld [vmem:[#allocation9 + $0x4] sm:$0xf]
          %v784 = vld [vmem:[#allocation9 + $0x8] sm:$0xf]
          %v785 = vld [vmem:[#allocation9 + $0xc] sm:$0xf]
          %v786 = vld [vmem:[#allocation9 + $0x10] sm:$0xf]
          %v787 = vld [vmem:[#allocation9 + $0x14] sm:$0xf]
          %v788 = vld [vmem:[#allocation9 + $0x18] sm:$0xf]
          %v789 = vld [vmem:[#allocation9 + $0x1c] sm:$0xf]
          %v790 = vld [vmem:[#allocation9 + $0x20] sm:$0xf]
          %v791 = vld [vmem:[#allocation9 + $0x24] sm:$0xf]
          %v792 = vld [vmem:[#allocation9 + $0x28] sm:$0xf]
          %v793 = vld [vmem:[#allocation9 + $0x2c] sm:$0xf]
          %v794 = vld [vmem:[#allocation9 + $0x30] sm:$0xf]
          %v795 = vld [vmem:[#allocation9 + $0x34] sm:$0xf]
          %v796 = vld [vmem:[#allocation9 + $0x38] sm:$0xf]
          %v797 = vld [vmem:[#allocation9 + $0x3c] sm:$0xf]
          %v798 = vld [vmem:[#allocation11] sm:$0x1]
          %v800 = vlaneseq
          %v801 = vshrl.u32 %v800, 7
          %v802 = vsub.s32 0, %v801
          %v803 = vrot.slane %v798, %v802
          %v821 = vunpack.c.l.b16 %v782
          %v822 = vunpack.c.l.b16 %v783
          %v823 = vunpack.c.l.b16 %v784
          %v824 = vunpack.c.l.b16 %v785
          %v825 = vunpack.c.l.b16 %v786
          %v826 = vunpack.c.l.b16 %v787
          %v827 = vunpack.c.l.b16 %v788
          %v828 = vunpack.c.l.b16 %v789
          %v829 = vunpack.c.l.b16 %v790
          %v830 = vunpack.c.l.b16 %v791
          %v831 = vunpack.c.l.b16 %v792
          %v832 = vunpack.c.l.b16 %v793
          %v833 = vunpack.c.l.b16 %v794
          %v834 = vunpack.c.l.b16 %v795
          %v835 = vunpack.c.l.b16 %v796
          %v836 = vunpack.c.l.b16 %v797
          %v837 = vpack.c.b16 %v822, %v821
          %v838 = vpack.c.b16 %v824, %v823
          %v839 = vpack.c.b16 %v826, %v825
          %v840 = vpack.c.b16 %v828, %v827
          %v841 = vpack.c.b16 %v830, %v829
          %v842 = vpack.c.b16 %v832, %v831
          %v843 = vpack.c.b16 %v834, %v833
          %v844 = vpack.c.b16 %v836, %v835
          %853 = vmatprep.subr.bf16.mxu0 0
          %854 = vmatpush1.bf16.msra.mxu0 %v837
          %855 = vmatprep.subr.bf16.mxu0 0
          %856 = vmatpush1.bf16.msra.mxu0 %v838
          %857 = vmatprep.subr.bf16.mxu0 0
          %858 = vmatpush1.bf16.msra.mxu0 %v839
          %859 = vmatprep.subr.bf16.mxu0 0
          %860 = vmatpush1.bf16.msra.mxu0 %v840
          %861 = vmatprep.subr.bf16.mxu0 0
          %862 = vmatpush1.bf16.msra.mxu0 %v841
          %863 = vmatprep.subr.bf16.mxu0 0
          %864 = vmatpush1.bf16.msra.mxu0 %v842
          %865 = vmatprep.subr.bf16.mxu0 0
          %866 = vmatpush1.bf16.msra.mxu0 %v843
          %867 = vmatprep.subr.bf16.mxu0 0
          %868 = vmatpush1.bf16.msra.mxu0 %v844
          %869 = vmatprep.subr.bf16.mxu0 0
          %870 = vmatpush1.bf16.msra.mxu0 0
          %871 = vmatprep.subr.bf16.mxu0 0
          %872 = vmatpush1.bf16.msra.mxu0 0
          %873 = vmatprep.subr.bf16.mxu0 0
          %874 = vmatpush1.bf16.msra.mxu0 0
          %875 = vmatprep.subr.bf16.mxu0 0
          %876 = vmatpush1.bf16.msra.mxu0 0
          %877 = vmatprep.subr.bf16.mxu0 0
          %878 = vmatpush1.bf16.msra.mxu0 0
          %879 = vmatprep.subr.bf16.mxu0 0
          %880 = vmatpush1.bf16.msra.mxu0 0
          %881 = vmatprep.subr.bf16.mxu0 0
          %882 = vmatpush1.bf16.msra.mxu0 0
          %883 = vmatprep.subr.bf16.mxu0 0
          %884 = vmatpush1.bf16.msra.mxu0 0
          %885 = vmatprep.mubr.bf16.mxu0 0
          %886 = vmatmul.mubr.bf16.gmra.mrb[0].mxu0 %v781
          %v887 = vpop.f32.mrb[0].mxu0
          %v888 = vadd.f32 %v803, %v887
          %v889 = vpop.f32.mrb[0].mxu0
          %v890 = vpop.f32.mrb[0].mxu0
          %v891 = vpop.f32.mrb[0].mxu0
          %892 = vdwg.mxu0
          %v893 = vmul.f32 %v888, %v888
          %v894 = vsel %vm528, %v893, 0.0
          %895 = vadd.xlane.f32.xlu0 %v894
          %v896 = vpop.xlane.xlu0 %895
          %v897 = vadd.f32 %v896, 1e-12
          %v898 = vrsqrt.pop %v897
          %v899 = vmul.f32 %v888, %v898
          %900 = vst [vmem:[#allocation12] sm:$0x3] %v899
        $region68: #{tpu_custom_call.1} parent=39 // pred_fallthru
          _
        // Predicated region
        $region69: #{tpu_custom_call.1} parent=39 // pred_check
          %p901 = pneg %p164
        $region70: #{tpu_custom_call.1} parent=39 // pred_check_branch
          %903 = sbr.rel (%p901) target = $region72
        $region71: #{tpu_custom_call.1} parent=39 // pred_region
          %s905 = ssub.s32 32, 32
          %906 = vsyncadd [#allocation5], %s905
          %s907 = smul.addr %s26, 32
          %s908 = scalar_lea.hbm %s5, %s907
          %s910 = sshll.u32 [#allocation12], 4
          %s911 = int_to_ptr.vmem [resolvable:$true] %s910
          %913 = dma.vmem_to_hbm [thread:$0]  %s911, 32, %s908, [#allocation5]
        $region72: #{tpu_custom_call.1} parent=39 // pred_fallthru
          _
        // Predicated region
        $region73: #{tpu_custom_call.1} parent=39 // pred_check
          %p914 = pneg %p164
        $region74: #{tpu_custom_call.1} parent=39 // pred_check_branch
          %916 = sbr.rel (%p914) target = $region76
        $region75: #{tpu_custom_call.1} parent=39 // pred_region
          %917 = dma.done [#allocation5], 32
        $region76: #{tpu_custom_call.1} parent=39 // pred_fallthru
          _
      $region40: #{tpu_custom_call.1} parent=5 // pred_fallthru
        _
      %p918 = scmp.le.s32.totalorder 2, %s17
      // Predicated region
      $region77: #{tpu_custom_call.1} parent=5 // pred_check
        %p919 = pneg %p918
      $region78: #{tpu_custom_call.1} parent=5 // pred_check_branch
        %921 = sbr.rel (%p919) target = $region80
      $region79: #{tpu_custom_call.1} parent=5 // pred_region
        %s922 = ssub.s32 %s17, 2
      $region80: #{tpu_custom_call.1} parent=5 // pred_fallthru
        _
    $region6: #{tpu_custom_call.1} parent=1 // loop_footer
      %s21 = sadd.s32 1, %s17
    $region7: #{tpu_custom_call.1} parent=1 // loop_footer_branch
      %16 = sbr.rel target = $region3
    $region8: #{tpu_custom_call.1} parent=1 // loop_exit
      _
    %923 = vsyncpa [#allocation4], 1
    %s924 = scalar_lea.sflag [#allocation4], 1
    %925 = vsyncpa %s924, 1
    %926 = vsyncpa [#allocation7], 1
    %927 = vsyncpa [#allocation10], 1
    %928 = vsyncpa [#allocation5], 1
    %s929 = scalar_lea.sflag [#allocation5], 1
    %930 = vsyncpa %s929, 1

</llo_original>
